<compile_context>
chip_gen: v6e
topology: v6e:2x2x1
jax: 0.10.0
libtpu: 0.0.40
codegen_flags: <defaults>
</compile_context>

<pallas_src>
import jax
import jax.numpy as jnp
from jax.experimental import pallas as pl
from jax.experimental.pallas import tpu as pltpu

_LANES = 128


def _conv1x1_sigmoid_kernel(x_ref, w_ref, o_ref):
    """Fused 1x1-conv (1 output channel, no bias) + sigmoid on one spatial tile.

    x_ref: (1, C, R, 128) f32 VMEM tile  -- dense (sublane, lane) spatial slab
    w_ref: (C, 128)       f32 VMEM       -- lane-replicated conv weight
    o_ref: (1, 1, R, 128)                -- lane-dense output tile
    """
    x = x_ref[0]                          # (C, R, 128)
    w = w_ref[...][:, None, :]            # (C, 1, 128) -> sublane-broadcast over R
    acc = jnp.sum(x * w, axis=0)          # (R, 128) channel reduction, full vregs
    o_ref[0, 0] = jax.nn.sigmoid(acc).astype(o_ref.dtype)


def _pick_tile_rows(rows: int, c: int, batch: int, max_tile_bytes: int) -> int:
    """Rows (groups of 128 lanes) per spatial tile.

    Multiple of 8 (or full extent for tiny inputs), sized from the per-buffer
    VMEM byte budget, and capped so a batch-1 input still produces >=2 grid
    steps (keeps both v7x TensorCores busy).  The last block may be partial.
    """
    if rows <= 8:
        return rows                                   # tiny input: full extent
    bytes_per_row = c * _LANES * 4                    # one (C, 128) f32 column
    cap = max(8, (max_tile_bytes // bytes_per_row) // 8 * 8)
    if batch < 2:
        half = max(8, -(-((rows + 1) // 2) // 8) * 8)  # ceil(rows/2), up to mult of 8
        cap = min(cap, half)
    return max(8, min(cap, (rows // 8) * 8))


def linear_probing_forward(
    x_nchw: jax.Array,
    weight: jax.Array,
    *,
    max_tile_bytes: int = 2 << 20,   # per input buffer; safe for v7x's 64 MiB VMEM
) -> jax.Array:
    """Forward pass equivalent to LinearProbingNet(input_dim=C)(x).

    Args:
      x_nchw: (B, C, H, W) float32 input (PyTorch NCHW convention).
      weight: (1, C, 1, 1) float32 conv weight (PyTorch Conv2d weight shape).
    Returns:
      (B, 1, H, W) float32 sigmoid(conv1x1(x)).
    """
    B, C, H, W = x_nchw.shape
    HW = H * W

    rows = pl.cdiv(HW, _LANES)
    HW_pad = rows * _LANES

    # Free reshape (no transpose): (B, C, H, W) -> (B, C, HW).
    x3 = x_nchw.reshape(B, C, HW)
    if HW_pad != HW:
        # TODO(synk): handle the ragged spatial tail in-kernel (masked last
        # block) to avoid this pad copy; for 128-aligned H*W (common case and
        # the demo) this branch is never taken and no data is moved.
        x3 = jnp.pad(x3, ((0, 0), (0, 0), (0, HW_pad - HW)))
    # Dense vreg layout: spatial axis split into (rows, 128) = (sublane, lane).
    x4 = x3.reshape(B, C, rows, _LANES)

    tile_rows = _pick_tile_rows(rows, C, B, max_tile_bytes)
    grid = (B, pl.cdiv(rows, tile_rows))

    # Lane-replicated weight: per-channel scale becomes a plain VPU multiply
    # (no cross-lane work in the kernel); constant block index -> fetched once.
    w_rep = jnp.broadcast_to(
        weight.reshape(C, 1).astype(jnp.float32), (C, _LANES)
    )

    cost = pl.CostEstimate(
        flops=2 * B * HW_pad * C,
        transcendentals=B * HW_pad,
        bytes_accessed=4 * (B * C * HW_pad + B * HW_pad + C * _LANES),
    )

    out4 = pl.pallas_call(
        _conv1x1_sigmoid_kernel,
        out_shape=jax.ShapeDtypeStruct((B, 1, rows, _LANES), x_nchw.dtype),
        grid_spec=pltpu.PrefetchScalarGridSpec(
            num_scalar_prefetch=0,
            grid=grid,
            in_specs=[
                # streaming read of x: one (C, tile_rows, 128) slab per step
                pl.BlockSpec((1, C, tile_rows, _LANES), lambda b, s: (b, 0, s, 0)),
                # tiny weight, same block every step (not re-fetched)
                pl.BlockSpec((C, _LANES), lambda b, s: (0, 0)),
            ],
            # lane-dense, sublane-dense output tile
            out_specs=pl.BlockSpec((1, 1, tile_rows, _LANES), lambda b, s: (b, 0, s, 0)),
        ),
        compiler_params=pltpu.CompilerParams(
            dimension_semantics=("parallel", "parallel"),
            vmem_limit_bytes=40 << 20,
        ),
        cost_estimate=cost,
    )(x4, w_rep)

    out3 = out4.reshape(B, 1, HW_pad)
    if HW_pad != HW:
        out3 = out3[:, :, :HW]
    # Already in NCHW order; reshape back to (B, 1, H, W).
    return out3.reshape(B, 1, H, W)


def init_params(input_dim: int, key: jax.Array) -> jax.Array:
    """Deterministic Conv2d(input_dim, 1, k=1, bias=False) weight init.

    Mimics PyTorch's default kaiming-uniform bound 1/sqrt(fan_in) with
    fan_in = input_dim * 1 * 1.  Shape matches PyTorch: (1, C, 1, 1).
    """
    bound = 1.0 / jnp.sqrt(jnp.float32(input_dim))
    return jax.random.uniform(
        key, (1, input_dim, 1, 1), dtype=jnp.float32, minval=-bound, maxval=bound
    )


if __name__ == "__main__":
    key = jax.random.PRNGKey(0)
    k_x, k_w = jax.random.split(key)

    B, C, H, W = 2, 4, 16, 16  # small NCHW input consistent with the module
    x = jax.random.normal(k_x, (B, C, H, W), dtype=jnp.float32)
    weight = init_params(C, k_w)

    out = linear_probing_forward(x, weight)
    out = jax.block_until_ready(out)

    # Reference check in plain JAX (1x1 conv == einsum over channel + sigmoid).
    ref = jax.nn.sigmoid(jnp.einsum("bchw,oc->bohw", x, weight.reshape(1, C)))
    assert out.shape == (B, 1, H, W), out.shape
    assert jnp.allclose(out, ref, atol=1e-5, rtol=1e-5), "mismatch vs reference"

    print("KERNEL_OK")
</pallas_src>

<mosaic_0001>
module attributes {stable_mosaic.version = 11 : i64} {
  func.func @_conv1x1_sigmoid_kernel(%arg0: i32, %arg1: i32, %arg2: memref<1x4x2x128xf32, #tpu.memory_space<vmem>>, %arg3: memref<4x128xf32, #tpu.memory_space<vmem>>, %arg4: memref<1x1x2x128xf32, #tpu.memory_space<vmem>>) attributes {dimension_semantics = [#tpu.dimension_semantics<parallel>, #tpu.dimension_semantics<parallel>], iteration_bounds = array<i64: 2, 1>, scalar_prefetch = 0 : i64, scratch_operands = 0 : i64, tpu.core_type = #tpu.core_type<tc>, window_params = [{transform_indices = @transform_0, window_bounds = array<i64: 1, 4, 2, 128>}, {pipeline_mode = #tpu.pipeline_mode<synchronous>, transform_indices = @transform_1, window_bounds = array<i64: 4, 128>}, {transform_indices = @transform_2, window_bounds = array<i64: 1, 1, 2, 128>}]} {
    %c0 = arith.constant 0 : index
    %c0_0 = arith.constant 0 : index
    %c0_1 = arith.constant 0 : index
    %c0_2 = arith.constant 0 : index
    %0 = vector.load %arg2[%c0, %c0_0, %c0_1, %c0_2] : memref<1x4x2x128xf32, #tpu.memory_space<vmem>>, vector<1x4x2x128xf32>
    %1 = vector.shape_cast %0 : vector<1x4x2x128xf32> to vector<4x2x128xf32>
    %c0_3 = arith.constant 0 : index
    %c0_4 = arith.constant 0 : index
    %2 = vector.load %arg3[%c0_3, %c0_4] : memref<4x128xf32, #tpu.memory_space<vmem>>, vector<4x128xf32>
    %3 = vector.shape_cast %2 : vector<4x128xf32> to vector<4x1x128xf32>
    %4 = vector.broadcast %3 : vector<4x1x128xf32> to vector<4x2x128xf32>
    %5 = arith.mulf %1, %4 : vector<4x2x128xf32>
    %cst = arith.constant dense<0.000000e+00> : vector<2x128xf32>
    %6 = vector.multi_reduction <add>, %5, %cst [0] : vector<4x2x128xf32> to vector<2x128xf32>
    %7 = arith.negf %6 : vector<2x128xf32>
    %8 = math.exp %7 : vector<2x128xf32>
    %cst_5 = arith.constant 1.000000e+00 : f32
    %9 = vector.broadcast %cst_5 : f32 to vector<2x128xf32>
    %10 = arith.addf %9, %8 : vector<2x128xf32>
    %11 = arith.divf %9, %10 : vector<2x128xf32>
    %c0_6 = arith.constant 0 : index
    %c0_7 = arith.constant 0 : index
    %c0_8 = arith.constant 0 : index
    %c0_9 = arith.constant 0 : index
    %12 = vector.load %arg4[%c0_6, %c0_7, %c0_8, %c0_9] : memref<1x1x2x128xf32, #tpu.memory_space<vmem>>, vector<1x1x2x128xf32>
    %13 = vector.shape_cast %12 : vector<1x1x2x128xf32> to vector<2x128xf32>
    %14 = vector.shape_cast %11 : vector<2x128xf32> to vector<1x1x2x128xf32>
    tpu.vector_store %arg4[%c0_6, %c0_7, %c0_8, %c0_9], %14 {strides = array<i32>} : memref<1x1x2x128xf32, #tpu.memory_space<vmem>>, vector<1x1x2x128xf32>,
    return
  }
  func.func @transform_0(%arg0: i32, %arg1: i32) -> (i32, i32, i32, i32) {
    %c0_i32 = arith.constant 0 : i32
    %c0_i32_0 = arith.constant 0 : i32
    %c0_i32_1 = arith.constant 0 : i32
    return %arg0, %c0_i32, %arg1, %c0_i32_0 : i32, i32, i32, i32
  }
  func.func @transform_1(%arg0: i32, %arg1: i32) -> (i32, i32) {
    %c0_i32 = arith.constant 0 : i32
    %c0_i32_0 = arith.constant 0 : i32
    %c0_i32_1 = arith.constant 0 : i32
    return %c0_i32, %c0_i32_0 : i32, i32
  }
  func.func @transform_2(%arg0: i32, %arg1: i32) -> (i32, i32, i32, i32) {
    %c0_i32 = arith.constant 0 : i32
    %c0_i32_0 = arith.constant 0 : i32
    %c0_i32_1 = arith.constant 0 : i32
    return %arg0, %c0_i32, %arg1, %c0_i32_0 : i32, i32, i32, i32
  }
}

</mosaic_0001>

<llo_original>
// kernel: tpu_custom_call.1
$region0: #{tpu_custom_call.1}
  #allocation0 [shape = 'u32[]', space=smem, size = 0x4, offset = 0x4, fixed_abs, tag = 'smem constant byte address 0x4 - core index']
  #allocation1 [shape = 'u32[144,128]{1,0:T(1,128)}', space=vmem, size = 0x12000, scoped, tag = 'internal scratch']
  %s0 = inlined_call_operand.hbm [shape: f32[2,4,2,128], index: 0, kind: input, shape index: {}]
  %s1 = inlined_call_operand.hbm [shape: f32[4,128], index: 1, kind: input, shape index: {}]
  %s2 = inlined_call_operand.hbm [shape: f32[2,1,2,128], index: 2, kind: output, shape index: {}]
  %s3 = sld [smem:[#allocation0]]
  $region49: #{tpu_custom_call.1} parent=0
    _
  %s5 = ssub.s32 1, %s3
  %s6 = scalar_select 0, %s5, %s3
  $region1: #{tpu_custom_call.1} parent=0
    #allocation2 [shape = 'u8[8192]{0}', space=vmem, size = 0x2000, scoped, tag = 'input window, operand 0']
    #allocation3 [shape = 's32[2]{0}', space=sflag, size = 0x8, scoped, tag = 'scoped memory for tpu_custom_call.1']
    #allocation4 [shape = 's32[2]{0}', space=sflag, size = 0x8, scoped, tag = 'scoped memory for tpu_custom_call.1']
    #allocation5 [shape = 'u8[2048]{0}', space=vmem, size = 0x800, scoped, tag = 'input window, operand 1, single buffered']
    #allocation6 [shape = 's32[1]{0}', space=sflag, size = 0x4, scoped, tag = 'scoped memory for tpu_custom_call.1']
    #allocation7 [shape = 'u8[2048]{0}', space=vmem, size = 0x800, scoped, tag = 'output window, operand 0']
    %7 = vsyncpa [#allocation3], 0
    %s8 = scalar_lea.sflag [#allocation3], 1
    %9 = vsyncpa %s8, 0
    %10 = vsyncpa [#allocation6], 0
    %11 = vsyncpa [#allocation4], 0
    %s12 = scalar_lea.sflag [#allocation4], 1
    %13 = vsyncpa %s12, 0
    loop: start=0, step=1, limit=4
    $region2: #{tpu_custom_call.1} parent=1 // loop_pre_header
      _
    $region3: #{tpu_custom_call.1} parent=1 // loop_header
      %s15 = sphi 0, %s19
      %p16 = scmp.ge.s32.totalorder %s15, 4
      %s22 = sphi 0, %s34
      %s23 = sphi 0, %s30
      %s24 = sphi 0, %s22
      %s25 = sphi 0, %s23
      %s26 = sphi 0, %s24
      %s27 = sphi 0, %s25
      %s39 = sphi 0, %s41
      %s42 = sphi 0, %s39
      %s43 = sphi 0, %s42
      %s59 = sphi 0, %s43
      %s63 = sphi 0, %s63
      %s65 = sphi 0, %s63
      %s66 = sphi 0, %s65
      %s80 = sphi 0, %s66
      %s88 = sphi 0, %s90
      %s91 = sphi 0, %s88
      %s92 = sphi 0, %s91
      %s108 = sphi 0, %s92
    $region4: #{tpu_custom_call.1} parent=1 // loop_header_branch
      %18 = sbr.rel (%p16) target = $region8
    $region5: #{tpu_custom_call.1} parent=1 // loop_body
      %s20 = ssub.s32 %s15, 1
      %s21 = ssub.s32 %s15, 2
      %s28 = sadd.s32 1, %s23
      %p29 = scmp.ge.s32.totalorder %s28, 1
      %s30 = scalar_select %p29, 0, %s28
      %s31 = sadd.s32 1, %s22
      %s32 = scalar_select %p29, %s31, %s22
      %p33 = scmp.ge.s32.totalorder %s32, 2
      %s34 = scalar_select %p33, 0, %s32
      %s35 = ssub.s32 %s22, %s34
      %s36 = ssub.s32 %s23, %s30
      %s37 = sor.u32 %s35, %s36
      %p38 = scmp.eq.s32.totalorder %s37, 0
      %s40 = sadd.s32 %s39, 1
      %s41 = scalar_select %p38, %s39, %s40
      %p44 = pneg %p38
      %p45 = scmp.eq.s32.totalorder %s15, 1
      %p46 = por %p44, %p45
      %p47 = scmp.ne.s32.totalorder %s39, %s42
      %p48 = scmp.eq.s32.totalorder %s15, 0
      %p49 = por %p47, %p48
      %p50 = scmp.ne.s32.totalorder %s39, %s42
      %p51 = scmp.eq.s32.totalorder %s20, 1
      %p52 = por %p50, %p51
      %p53 = scmp.ne.s32.totalorder %s42, %s43
      %p54 = scmp.eq.s32.totalorder %s20, 0
      %p55 = por %p53, %p54
      %p56 = scmp.ne.s32.totalorder %s42, %s43
      %p57 = scmp.eq.s32.totalorder %s21, 1
      %p58 = por %p56, %p57
      %p60 = scmp.ne.s32.totalorder %s43, %s59
      %p61 = scmp.eq.s32.totalorder %s21, 0
      %p62 = por %p60, %p61
      %s64 = sadd.s32 %s63, 1
      %p67 = scmp.eq.s32.totalorder %s15, 1
      %p68 = scmp.ne.s32.totalorder %s63, %s65
      %p69 = scmp.eq.s32.totalorder %s15, 0
      %p70 = por %p68, %p69
      %p71 = scmp.ne.s32.totalorder %s63, %s65
      %p72 = scmp.eq.s32.totalorder %s20, 1
      %p73 = por %p71, %p72
      %p74 = scmp.ne.s32.totalorder %s65, %s66
      %p75 = scmp.eq.s32.totalorder %s20, 0
      %p76 = por %p74, %p75
      %p77 = scmp.ne.s32.totalorder %s65, %s66
      %p78 = scmp.eq.s32.totalorder %s21, 1
      %p79 = por %p77, %p78
      %p81 = scmp.ne.s32.totalorder %s66, %s80
      %p82 = scmp.eq.s32.totalorder %s21, 0
      %p83 = por %p81, %p82
      %s84 = ssub.s32 %s22, %s34
      %s85 = ssub.s32 %s23, %s30
      %s86 = sor.u32 %s84, %s85
      %p87 = scmp.eq.s32.totalorder %s86, 0
      %s89 = sadd.s32 %s88, 1
      %s90 = scalar_select %p87, %s88, %s89
      %p93 = pneg %p87
      %p94 = scmp.eq.s32.totalorder %s15, 1
      %p95 = por %p93, %p94
      %p96 = scmp.ne.s32.totalorder %s88, %s91
      %p97 = scmp.eq.s32.totalorder %s15, 0
      %p98 = por %p96, %p97
      %p99 = scmp.ne.s32.totalorder %s88, %s91
      %p100 = scmp.eq.s32.totalorder %s20, 1
      %p101 = por %p99, %p100
      %p102 = scmp.ne.s32.totalorder %s91, %s92
      %p103 = scmp.eq.s32.totalorder %s20, 0
      %p104 = por %p102, %p103
      %p105 = scmp.ne.s32.totalorder %s91, %s92
      %p106 = scmp.eq.s32.totalorder %s21, 1
      %p107 = por %p105, %p106
      %p109 = scmp.ne.s32.totalorder %s92, %s108
      %p110 = scmp.eq.s32.totalorder %s21, 0
      %p111 = por %p109, %p110
      %p112 = scmp.le.s32.totalorder 1, %s15
      %p113 = scmp.lt.s32.totalorder %s15, 3
      %p114 = pnand %p112, %p113
      %p115 = pneg %p114
      // Predicated region
      $region9: #{tpu_custom_call.1} parent=5 // pred_check
        _
      $region10: #{tpu_custom_call.1} parent=5 // pred_check_branch
        %117 = sbr.rel (%p114) target = $region12
      $region11: #{tpu_custom_call.1} parent=5 // pred_region
        %s118 = ssub.s32 %s15, 1
        // Predicated region
        $region13: #{tpu_custom_call.1} parent=11 // pred_check
          %p119 = pneg %p76
        $region14: #{tpu_custom_call.1} parent=11 // pred_check_branch
          %121 = sbr.rel (%p119) target = $region16
        $region15: #{tpu_custom_call.1} parent=11 // pred_region
          %s123 = ssub.s32 64, 64
          %124 = vsyncadd [#allocation6], %s123
          %s126 = sshll.u32 [#allocation5], 4
          %s127 = int_to_ptr.vmem [resolvable:$true] %s126
          %129 = dma.hbm_to_vmem [thread:$0]  %s1, 64, %s127, [#allocation6]
        $region16: #{tpu_custom_call.1} parent=11 // pred_fallthru
          _
      $region12: #{tpu_custom_call.1} parent=5 // pred_fallthru
        _
      %p130 = scmp.lt.s32.totalorder %s15, 2
      // Predicated region
      $region17: #{tpu_custom_call.1} parent=5 // pred_check
        %p131 = pneg %p130
      $region18: #{tpu_custom_call.1} parent=5 // pred_check_branch
        %133 = sbr.rel (%p131) target = $region20
      $region19: #{tpu_custom_call.1} parent=5 // pred_region
        // Predicated region
        $region21: #{tpu_custom_call.1} parent=19 // pred_check
          %p134 = pneg %p49
        $region22: #{tpu_custom_call.1} parent=19 // pred_check_branch
          %136 = sbr.rel (%p134) target = $region24
        $region23: #{tpu_custom_call.1} parent=19 // pred_region
          %s137 = sand.u32 %s39, 1
          %s138 = scalar_lea.sflag [#allocation3], %s137
          %s139 = sand.u32 %s39, 1
          %s140 = smul.addr %s139, 8
          %s141 = scalar_lea.vmem [#allocation2], %s140
          %s143 = ssub.s32 128, 128
          %144 = vsyncadd %s138, %s143
          %s145 = smul.addr %s22, 4
          %s146 = sadd.s32 %s23, %s145
          %s147 = smul.addr %s146, 32
          %s148 = scalar_lea.hbm %s0, %s147
          %s149 = sshll.u32 %s141, 4
          %s150 = int_to_ptr.vmem [resolvable:$true] %s149
          %155 = dma.hbm_to_vmem [thread:$0]  %s148, 128, %s150, %s138, 32, 32, 2
        $region24: #{tpu_custom_call.1} parent=19 // pred_fallthru
          _
      $region20: #{tpu_custom_call.1} parent=5 // pred_fallthru
        _
      %p156 = scmp.le.s32.totalorder 1, %s15
      %p157 = scmp.lt.s32.totalorder %s15, 3
      %p158 = pnand %p156, %p157
      %p159 = pneg %p158
      // Predicated region
      $region25: #{tpu_custom_call.1} parent=5 // pred_check
        _
      $region26: #{tpu_custom_call.1} parent=5 // pred_check_branch
        %161 = sbr.rel (%p158) target = $region28
      $region27: #{tpu_custom_call.1} parent=5 // pred_region
        %s162 = ssub.s32 %s15, 1
        %s163 = sand.u32 %s42, 1
        %s164 = scalar_lea.sflag [#allocation3], %s163
        %s165 = sand.u32 %s42, 1
        %s166 = smul.addr %s165, 8
        %s167 = scalar_lea.vmem [#allocation2], %s166
        // Predicated region
        $region29: #{tpu_custom_call.1} parent=27 // pred_check
          %p168 = pneg %p55
        $region30: #{tpu_custom_call.1} parent=27 // pred_check_branch
          %170 = sbr.rel (%p168) target = $region32
        $region31: #{tpu_custom_call.1} parent=27 // pred_region
          %171 = dma.done %s164, 128
        $region32: #{tpu_custom_call.1} parent=27 // pred_fallthru
          _
        // Predicated region
        $region33: #{tpu_custom_call.1} parent=27 // pred_check
          %p172 = pneg %p76
        $region34: #{tpu_custom_call.1} parent=27 // pred_check_branch
          %174 = sbr.rel (%p172) target = $region36
        $region35: #{tpu_custom_call.1} parent=27 // pred_region
          %175 = dma.done [#allocation6], 64
        $region36: #{tpu_custom_call.1} parent=27 // pred_fallthru
          _
        %s176 = sand.u32 %s42, 1
        %s177 = scalar_lea.sflag [#allocation3], %s176
        %s178 = sand.u32 %s42, 1
        %s179 = smul.addr %s178, 8
        %s180 = scalar_lea.vmem [#allocation2], %s179
        %p181 = pneg %p55
        %p182 = pneg %p52
        %p183 = pneg %p76
        %p184 = pneg %p73
        %p185 = pneg %p104
        %p186 = pneg %p101
        %s187 = sand.u32 %s91, 1
        %s188 = scalar_lea.sflag [#allocation4], %s187
        %s189 = sand.u32 %s91, 1
        %s190 = smul.addr %s189, 2
        %s191 = scalar_lea.vmem [#allocation7], %s190
        %v192 = vld [vmem:[%s167] sm:$0x3]
        %v193 = vld [vmem:[%s167 + $0x2] sm:$0x3]
        %v194 = vld [vmem:[%s167 + $0x4] sm:$0x3]
        %v195 = vld [vmem:[%s167 + $0x6] sm:$0x3]
        %v196 = vld [vmem:[#allocation5] sm:$0xf]
        %v199 = vunpack.c.l.s4 1966171168
        %v200 = vunpack.c.0.s8 %v199
        %v201 = vlaneseq
        %v202 = vshrl.u32 %v201, 7
        %v203 = vsub.s32 %v200, %v202
        %v204 = vrot.slane %v196, %v203
        %v205 = vcombine.high %v204, %v204
        %v207 = vunpack.c.l.s4 1966171168
        %v208 = vunpack.c.0.s8 %v207
        %v209 = vlaneseq
        %v210 = vshrl.u32 %v209, 7
        %v211 = vsub.s32 %v208, %v210
        %v212 = vrot.slane %v204, %v211
        %v214 = vunpack.c.l.s4 1966171168
        %v215 = vunpack.c.0.s8 %v214
        %v216 = vlaneseq
        %v217 = vshrl.u32 %v216, 7
        %v218 = vsub.s32 %v215, %v217
        %v219 = vrot.slane %v205, %v218
        %v220 = vcombine.high %v212, %v212
        %v221 = vcombine.high %v219, %v219
        %v222 = vlaneseq
        %v223 = vshrl.u32 %v222, 7
        %v224 = vsub.s32 0, %v223
        %v225 = vrot.slane %v212, %v224
        %v226 = vlaneseq
        %v227 = vshrl.u32 %v226, 7
        %v228 = vsub.s32 0, %v227
        %v229 = vrot.slane %v219, %v228
        %v230 = vlaneseq
        %v231 = vshrl.u32 %v230, 7
        %v232 = vsub.s32 0, %v231
        %v233 = vrot.slane %v220, %v232
        %v234 = vlaneseq
        %v235 = vshrl.u32 %v234, 7
        %v236 = vsub.s32 0, %v235
        %v237 = vrot.slane %v221, %v236
        %v242 = vmul.f32 %v192, %v225
        %v243 = vmul.f32 %v193, %v229
        %v244 = vmul.f32 %v194, %v233
        %v245 = vmul.f32 %v195, %v237
        %vm246 = vcmask 1041408
        %v247 = vsel %vm246, %v242, 0.0
        %v248 = vsel %vm246, %v243, 0.0
        %v249 = vadd.f32 %v247, %v248
        %v250 = vsel %vm246, %v244, 0.0
        %v251 = vadd.f32 %v249, %v250
        %v252 = vsel %vm246, %v245, 0.0
        %v253 = vadd.f32 %v251, %v252
        %v254 = vxor.u32 %v253, 2147483648
        %v255 = vmul.f32 %v254, 1.442695
        %v256 = vpow.pop %v255
        %v257 = vadd.f32 %v256, 1.0
        %v258 = vrcp.pop %v257
        %v259 = vmul.f32 1.0, %v258
        %260 = vst [vmem:[%s191] sm:$0x3] %v259
        %s261 = sand.u32 %s91, 1
        %s262 = scalar_lea.sflag [#allocation4], %s261
        %s263 = sand.u32 %s91, 1
        %s264 = smul.addr %s263, 2
        %s265 = scalar_lea.vmem [#allocation7], %s264
        // Predicated region
        $region37: #{tpu_custom_call.1} parent=27 // pred_check
          %p266 = pneg %p101
        $region38: #{tpu_custom_call.1} parent=27 // pred_check_branch
          %268 = sbr.rel (%p266) target = $region40
        $region39: #{tpu_custom_call.1} parent=27 // pred_region
          %s270 = ssub.s32 32, 32
          %271 = vsyncadd %s262, %s270
          %s272 = sadd.s32 %s25, %s24
          %s273 = smul.addr %s272, 32
          %s274 = scalar_lea.hbm %s2, %s273
          %s276 = sshll.u32 %s265, 4
          %s277 = int_to_ptr.vmem [resolvable:$true] %s276
          %279 = dma.vmem_to_hbm [thread:$0]  %s277, 32, %s274, %s262
        $region40: #{tpu_custom_call.1} parent=27 // pred_fallthru
          _
      $region28: #{tpu_custom_call.1} parent=5 // pred_fallthru
        _
      %p280 = scmp.le.s32.totalorder 2, %s15
      // Predicated region
      $region41: #{tpu_custom_call.1} parent=5 // pred_check
        %p281 = pneg %p280
      $region42: #{tpu_custom_call.1} parent=5 // pred_check_branch
        %283 = sbr.rel (%p281) target = $region44
      $region43: #{tpu_custom_call.1} parent=5 // pred_region
        %s284 = ssub.s32 %s15, 2
        // Predicated region
        $region45: #{tpu_custom_call.1} parent=43 // pred_check
          %p285 = pneg %p107
        $region46: #{tpu_custom_call.1} parent=43 // pred_check_branch
          %287 = sbr.rel (%p285) target = $region48
        $region47: #{tpu_custom_call.1} parent=43 // pred_region
          %s288 = sand.u32 %s92, 1
          %s289 = scalar_lea.sflag [#allocation4], %s288
          %s290 = sand.u32 %s92, 1
          %s291 = smul.addr %s290, 2
          %s292 = scalar_lea.vmem [#allocation7], %s291
          %293 = dma.done %s289, 32
        $region48: #{tpu_custom_call.1} parent=43 // pred_fallthru
          _
      $region44: #{tpu_custom_call.1} parent=5 // pred_fallthru
        _
    $region6: #{tpu_custom_call.1} parent=1 // loop_footer
      %s19 = sadd.s32 1, %s15
    $region7: #{tpu_custom_call.1} parent=1 // loop_footer_branch
      %14 = sbr.rel target = $region3
    $region8: #{tpu_custom_call.1} parent=1 // loop_exit
      _
    %294 = vsyncpa [#allocation3], 1
    %s295 = scalar_lea.sflag [#allocation3], 1
    %296 = vsyncpa %s295, 1
    %297 = vsyncpa [#allocation6], 1
    %298 = vsyncpa [#allocation4], 1
    %s299 = scalar_lea.sflag [#allocation4], 1
    %300 = vsyncpa %s299, 1

</llo_original>
